<compile_context>
chip_gen: v6e
topology: v6e:2x2x1
jax: 0.10.0
libtpu: 0.0.40
codegen_flags: <defaults>
</compile_context>

<pallas_src>
import jax
import jax.numpy as jnp
from jax.experimental import pallas as pl
from jax.experimental.pallas import tpu as pltpu

_NEG = -1e30  # pad value for the class axis (ignored by the softmax)


def _make_kernel():
    def kernel(x_ref, wt_ref, b_ref, o_ref, ls_ref):
        # x_ref:  (TB, Cp)   logits tile (batch tile, padded class axis)
        # wt_ref: (Cp, TN)   W.T tile (input classes x output-class tile)
        # b_ref:  (1,  TN)   bias tile
        # o_ref:  (TB, TN)   calibrated logits tile
        # ls_ref: (TB, Cp)   VMEM scratch holding log_softmax(x) for this batch tile

        # Compute log_softmax once per batch tile (j == 0), reuse across j.
        @pl.when(pl.program_id(1) == 0)
        def _():
            x = x_ref[...].astype(jnp.float32)
            m = jnp.max(x, axis=-1, keepdims=True)
            shifted = x - m
            lse = jnp.log(jnp.sum(jnp.exp(shifted), axis=-1, keepdims=True))
            ls_ref[...] = (shifted - lse).astype(ls_ref.dtype)

        y = jnp.dot(ls_ref[...], wt_ref[...], preferred_element_type=jnp.float32)
        y = y + b_ref[...].astype(jnp.float32)
        o_ref[...] = y.astype(o_ref.dtype)

    return kernel


def dirichlet_calibration_forward(logits, W, b, *, block_b=None, tn=None):
    """logits: (B, C) float; W: (C, C) PyTorch nn.Linear layout (out, in); b: (C,)."""
    B, C = logits.shape
    out_dtype = logits.dtype

    # --- pad the class axis to a multiple of 128 (lane-dense output / full MXU) ---
    Cp = ((C + 127) // 128) * 128

    # --- choose tiles ---
    if block_b is None:
        block_b = max(8, (1 << 20) // (Cp * 4))        # ~1 MiB f32 x-tile
    block_b = max(8, min(block_b, ((B + 7) // 8) * 8))
    block_b = (block_b // 8) * 8

    if tn is None:
        tn = 128
        for cand in (512, 256, 128):
            if Cp % cand == 0:
                tn = cand
                break
    assert Cp % tn == 0

    Bp = pl.cdiv(B, block_b) * block_b

    # --- pad operands ---
    x = logits.astype(jnp.float32)
    if Cp != C:
        x = jnp.pad(x, ((0, 0), (0, Cp - C)), constant_values=_NEG)
    if Bp != B:
        x = jnp.pad(x, ((0, Bp - B), (0, 0)))           # padded rows discarded later

    wt = W.T.astype(jnp.float32)                        # (C_in, C_out)
    if Cp != C:
        wt = jnp.pad(wt, ((0, Cp - C), (0, Cp - C)))    # zero pad -> pads contribute 0
        b2 = jnp.pad(b.astype(jnp.float32), (0, Cp - C)).reshape(1, Cp)
    else:
        b2 = b.astype(jnp.float32).reshape(1, Cp)

    use_bf16 = Cp >= 256
    if use_bf16:
        wt = wt.astype(jnp.bfloat16)                    # halves W DMA, 2x MXU rate
    ls_dtype = jnp.bfloat16 if use_bf16 else jnp.float32

    grid = (Bp // block_b, Cp // tn)

    cost = pl.CostEstimate(
        flops=2 * Bp * Cp * Cp,
        transcendentals=Bp * Cp,
        bytes_accessed=(4 * Bp * Cp                       # x read
                        + jnp.dtype(out_dtype).itemsize * Bp * Cp   # out write
                        + wt.dtype.itemsize * Cp * Cp * (Bp // block_b)  # W per batch step
                        + 4 * Cp),
    )

    out = pl.pallas_call(
        _make_kernel(),
        out_shape=jax.ShapeDtypeStruct((Bp, Cp), out_dtype),
        grid=grid,
        in_specs=[
            pl.BlockSpec((block_b, Cp), lambda i, j: (i, 0)),  # logits tile (resident over j)
            pl.BlockSpec((Cp, tn), lambda i, j: (0, j)),       # W.T column tile
            pl.BlockSpec((1, tn), lambda i, j: (0, j)),        # bias tile
        ],
        out_specs=pl.BlockSpec((block_b, tn), lambda i, j: (i, j)),
        scratch_shapes=[pltpu.VMEM((block_b, Cp), ls_dtype)],  # log_softmax cache
        compiler_params=pltpu.CompilerParams(
            dimension_semantics=("parallel", "arbitrary")),    # j carries scratch state
        cost_estimate=cost,
    )(x, wt, b2)

    return out[:B, :C]


def _reference(logits, W, b):
    ls = jax.nn.log_softmax(logits.astype(jnp.float32), axis=1)
    return ls @ W.T + b


if __name__ == "__main__":
    key = jax.random.PRNGKey(0)

    # --- case 1: small deterministic example (C=16 -> padded to 128, f32 MXU path) ---
    B, C = 8, 16
    k_x, k_w, k_b = jax.random.split(key, 3)
    x = jax.random.normal(k_x, (B, C), dtype=jnp.float32)
    bound = 1.0 / jnp.sqrt(jnp.float32(C))
    W = jax.random.uniform(k_w, (C, C), jnp.float32, -bound, bound)
    b = jax.random.uniform(k_b, (C,), jnp.float32, -bound, bound)

    out = dirichlet_calibration_forward(x, W, b)
    out = jax.block_until_ready(out)
    ref = _reference(x, W, b)
    assert out.shape == (B, C)
    assert jnp.allclose(out, ref, atol=1e-5, rtol=1e-5), "case1 mismatch vs reference"

    # --- case 2: batch padding, multi-step grid, bf16 MXU path, scratch reuse across j ---
    B2, C2 = 40, 200  # Cp=256 -> bf16 path; block_b=16 -> Bp=48; tn=128 -> 2 j-steps
    k_x2, k_w2, k_b2 = jax.random.split(jax.random.PRNGKey(1), 3)
    x2 = jax.random.normal(k_x2, (B2, C2), dtype=jnp.float32)
    bound2 = 1.0 / jnp.sqrt(jnp.float32(C2))
    W2 = jax.random.uniform(k_w2, (C2, C2), jnp.float32, -bound2, bound2)
    b2 = jax.random.uniform(k_b2, (C2,), jnp.float32, -bound2, bound2)

    out2 = dirichlet_calibration_forward(x2, W2, b2, block_b=16, tn=128)
    out2 = jax.block_until_ready(out2)
    ref2 = _reference(x2, W2, b2)
    assert out2.shape == (B2, C2)
    assert jnp.allclose(out2, ref2, atol=1e-1, rtol=1e-2), "case2 mismatch vs reference"

    print("KERNEL_OK")
</pallas_src>

<mosaic_0001>
module attributes {stable_mosaic.version = 11 : i64} {
  func.func @kernel(%arg0: i32, %arg1: i32, %arg2: memref<8x128xf32, #tpu.memory_space<vmem>>, %arg3: memref<128x128xf32, #tpu.memory_space<vmem>>, %arg4: memref<1x128xf32, #tpu.memory_space<vmem>>, %arg5: memref<8x128xf32, #tpu.memory_space<vmem>>, %arg6: memref<8x128xf32, #tpu.memory_space<vmem>>) attributes {dimension_semantics = [#tpu.dimension_semantics<parallel>, #tpu.dimension_semantics<arbitrary>], iteration_bounds = array<i64: 1, 1>, scalar_prefetch = 0 : i64, scratch_operands = 1 : i64, tpu.core_type = #tpu.core_type<tc>, window_params = [{transform_indices = @transform_0, window_bounds = array<i64: 8, 128>}, {transform_indices = @transform_1, window_bounds = array<i64: 128, 128>}, {transform_indices = @transform_2, window_bounds = array<i64: 1, 128>}, {transform_indices = @transform_3, window_bounds = array<i64: 8, 128>}]} {
    %c0_i32 = arith.constant 0 : i32
    %0 = arith.cmpi eq, %arg1, %c0_i32 : i32
    %1 = arith.extui %0 : i1 to i32
    %c0_i32_0 = arith.constant 0 : i32
    %2 = arith.cmpi ne, %1, %c0_i32_0 : i32
    scf.if %2 {
      %c0_8 = arith.constant 0 : index
      %c0_9 = arith.constant 0 : index
      %10 = vector.load %arg2[%c0_8, %c0_9] : memref<8x128xf32, #tpu.memory_space<vmem>>, vector<8x128xf32>
      %cst_10 = arith.constant dense<0xFF800000> : vector<8xf32>
      %11 = vector.multi_reduction <maximumf>, %10, %cst_10 [1] : vector<8x128xf32> to vector<8xf32>
      %12 = vector.shape_cast %11 : vector<8xf32> to vector<8x1xf32>
      %13 = vector.broadcast %12 : vector<8x1xf32> to vector<8x128xf32>
      %14 = arith.subf %10, %13 : vector<8x128xf32>
      %15 = math.exp %14 : vector<8x128xf32>
      %cst_11 = arith.constant dense<0.000000e+00> : vector<8xf32>
      %16 = vector.multi_reduction <add>, %15, %cst_11 [1] : vector<8x128xf32> to vector<8xf32>
      %17 = vector.shape_cast %16 : vector<8xf32> to vector<8x1xf32>
      %18 = math.log %17 : vector<8x1xf32>
      %19 = vector.broadcast %18 : vector<8x1xf32> to vector<8x128xf32>
      %20 = arith.subf %14, %19 : vector<8x128xf32>
      %c0_12 = arith.constant 0 : index
      %c0_13 = arith.constant 0 : index
      %21 = vector.load %arg6[%c0_12, %c0_13] : memref<8x128xf32, #tpu.memory_space<vmem>>, vector<8x128xf32>
      tpu.vector_store %arg6[%c0_12, %c0_13], %20 {strides = array<i32>} : memref<8x128xf32, #tpu.memory_space<vmem>>, vector<8x128xf32>,
    } else {
    }
    %c0 = arith.constant 0 : index
    %c0_1 = arith.constant 0 : index
    %3 = vector.load %arg6[%c0, %c0_1] : memref<8x128xf32, #tpu.memory_space<vmem>>, vector<8x128xf32>
    %c0_2 = arith.constant 0 : index
    %c0_3 = arith.constant 0 : index
    %4 = vector.load %arg3[%c0_2, %c0_3] : memref<128x128xf32, #tpu.memory_space<vmem>>, vector<128x128xf32>
    %cst = arith.constant dense<0.000000e+00> : vector<8x128xf32>
    %5 = tpu.matmul %3, %4, %cst {dimension_numbers = #tpu.dot_dimension_numbers<[1], [0], [0], [1], [0, 0, 1, 1], [], []>} : vector<8x128xf32>, vector<128x128xf32>, vector<8x128xf32> -> vector<8x128xf32>
    %c0_4 = arith.constant 0 : index
    %c0_5 = arith.constant 0 : index
    %6 = vector.load %arg4[%c0_4, %c0_5] : memref<1x128xf32, #tpu.memory_space<vmem>>, vector<1x128xf32>
    %7 = vector.broadcast %6 : vector<1x128xf32> to vector<8x128xf32>
    %8 = arith.addf %5, %7 : vector<8x128xf32>
    %c0_6 = arith.constant 0 : index
    %c0_7 = arith.constant 0 : index
    %9 = vector.load %arg5[%c0_6, %c0_7] : memref<8x128xf32, #tpu.memory_space<vmem>>, vector<8x128xf32>
    tpu.vector_store %arg5[%c0_6, %c0_7], %8 {strides = array<i32>} : memref<8x128xf32, #tpu.memory_space<vmem>>, vector<8x128xf32>,
    return
  }
  func.func @transform_0(%arg0: i32, %arg1: i32) -> (i32, i32) {
    %c0_i32 = arith.constant 0 : i32
    %c0_i32_0 = arith.constant 0 : i32
    return %arg0, %c0_i32 : i32, i32
  }
  func.func @transform_1(%arg0: i32, %arg1: i32) -> (i32, i32) {
    %c0_i32 = arith.constant 0 : i32
    %c0_i32_0 = arith.constant 0 : i32
    return %c0_i32, %arg1 : i32, i32
  }
  func.func @transform_2(%arg0: i32, %arg1: i32) -> (i32, i32) {
    %c0_i32 = arith.constant 0 : i32
    %c0_i32_0 = arith.constant 0 : i32
    return %c0_i32, %arg1 : i32, i32
  }
  func.func @transform_3(%arg0: i32, %arg1: i32) -> (i32, i32) {
    %c0_i32 = arith.constant 0 : i32
    return %arg0, %arg1 : i32, i32
  }
}

</mosaic_0001>

<llo_original>
// kernel: tpu_custom_call.1
$region0: #{tpu_custom_call.1}
  #allocation0 [shape = 'u32[]', space=smem, size = 0x4, offset = 0x4, fixed_abs, tag = 'smem constant byte address 0x4 - core index']
  #allocation1 [shape = 'u32[144,128]{1,0:T(1,128)}', space=vmem, size = 0x12000, scoped, tag = 'internal scratch']
  #allocation2 [shape = 'f32[8,128]{1,0:T(8,128)}', space=vmem, size = 0x1000, scoped, tag = 'scratch operand']
  %s0 = inlined_call_operand.hbm [shape: f32[8,128], index: 0, kind: input, shape index: {}]
  %s1 = inlined_call_operand.hbm [shape: f32[128,128], index: 1, kind: input, shape index: {}]
  %s2 = inlined_call_operand.vmem [shape: f32[1,128], index: 2, kind: input, shape index: {}]
  %s3 = inlined_call_operand.hbm [shape: f32[8,128], index: 3, kind: output, shape index: {}]
  %s4 = sld [smem:[#allocation0]]
  $region34: #{tpu_custom_call.1} parent=0
    _
  %s6 = ssub.s32 1, %s4
  %s7 = scalar_select 0, %s6, %s4
  $region1: #{tpu_custom_call.1} parent=0
    #allocation3 [shape = 'u8[4096]{0}', space=vmem, size = 0x1000, scoped, tag = 'input window, operand 0, single buffered']
    #allocation4 [shape = 's32[1]{0}', space=sflag, size = 0x4, scoped, tag = 'scoped memory for tpu_custom_call.1']
    #allocation5 [shape = 's32[1]{0}', space=sflag, size = 0x4, scoped, tag = 'scoped memory for tpu_custom_call.1']
    #allocation6 [shape = 'u8[65536]{0}', space=vmem, size = 0x10000, scoped, tag = 'input window, operand 1, single buffered']
    #allocation7 [shape = 's32[1]{0}', space=sflag, size = 0x4, scoped, tag = 'scoped memory for tpu_custom_call.1']
    #allocation8 [shape = 'u8[4096]{0}', space=vmem, size = 0x1000, scoped, tag = 'output window, operand 0, single buffered']
    %8 = vsyncpa [#allocation4], 0
    %9 = vsyncpa [#allocation7], 0
    %10 = vsyncpa [#allocation5], 0
    // Predicated region
    $region2: #{tpu_custom_call.1} parent=1 // pred_check
      _
    $region3: #{tpu_custom_call.1} parent=1 // pred_check_branch
      %12 = sbr.rel (0) target = $region5
    $region4: #{tpu_custom_call.1} parent=1 // pred_region
      %s14 = ssub.s32 128, 128
      %15 = vsyncadd [#allocation4], %s14
      %s17 = sshll.u32 [#allocation3], 4
      %s18 = int_to_ptr.vmem [resolvable:$true] %s17
      %20 = dma.hbm_to_vmem [thread:$0]  %s0, 128, %s18, [#allocation4]
    $region5: #{tpu_custom_call.1} parent=1 // pred_fallthru
      _
    // Predicated region
    $region6: #{tpu_custom_call.1} parent=1 // pred_check
      _
    $region7: #{tpu_custom_call.1} parent=1 // pred_check_branch
      %22 = sbr.rel (0) target = $region9
    $region8: #{tpu_custom_call.1} parent=1 // pred_region
      %s24 = ssub.s32 2048, 2048
      %25 = vsyncadd [#allocation7], %s24
      %s26 = sshll.u32 [#allocation6], 4
      %s27 = int_to_ptr.vmem [resolvable:$true] %s26
      %32 = dma.hbm_to_vmem [thread:$0]  %s1, 2048, %s27, [#allocation7], 128, 128, 8
    $region9: #{tpu_custom_call.1} parent=1 // pred_fallthru
      _
    // Predicated region
    $region10: #{tpu_custom_call.1} parent=1 // pred_check
      _
    $region11: #{tpu_custom_call.1} parent=1 // pred_check_branch
      %34 = sbr.rel (0) target = $region13
    $region12: #{tpu_custom_call.1} parent=1 // pred_region
      _
    $region13: #{tpu_custom_call.1} parent=1 // pred_fallthru
      _
    // Predicated region
    $region14: #{tpu_custom_call.1} parent=1 // pred_check
      _
    $region15: #{tpu_custom_call.1} parent=1 // pred_check_branch
      %36 = sbr.rel (0) target = $region17
    $region16: #{tpu_custom_call.1} parent=1 // pred_region
      %37 = dma.done [#allocation4], 128
    $region17: #{tpu_custom_call.1} parent=1 // pred_fallthru
      _
    // Predicated region
    $region18: #{tpu_custom_call.1} parent=1 // pred_check
      _
    $region19: #{tpu_custom_call.1} parent=1 // pred_check_branch
      %39 = sbr.rel (0) target = $region21
    $region20: #{tpu_custom_call.1} parent=1 // pred_region
      %40 = dma.done [#allocation7], 2048
    $region21: #{tpu_custom_call.1} parent=1 // pred_fallthru
      _
    %p41 = scmp.eq.s32.totalorder 0, 0
    // Predicated region
    $region22: #{tpu_custom_call.1} parent=1 // pred_check
      %p42 = pneg %p41
    $region23: #{tpu_custom_call.1} parent=1 // pred_check_branch
      %44 = sbr.rel (%p42) target = $region25
    $region24: #{tpu_custom_call.1} parent=1 // pred_region
      %v45 = vld [vmem:[#allocation3] sm:$0xff]
      %46 = vmax.xlane.f32.xlu0 %v45
      %v47 = vpop.xlane.xlu0 %46
      %v48 = vsub.f32 %v45, %v47
      %v49 = vmul.f32 %v48, 1.442695
      %v50 = vpow.pop %v49
      %51 = vadd.xlane.f32.xlu0 %v50
      %v52 = vpop.xlane.xlu0 %51
      %v53 = vlog2.pop %v52
      %v54 = vmul.f32 %v53, 0.6931472
      %v55 = vsub.f32 %v48, %v54
      %56 = vst [vmem:[#allocation2] sm:$0xff] %v55
    $region25: #{tpu_custom_call.1} parent=1 // pred_fallthru
      _
    %v57 = vld [vmem:[#allocation2] sm:$0xff]
    %v58 = vld [vmem:[#allocation6] sm:$0xff]
    %v59 = vld [vmem:[#allocation6 + $0x8] sm:$0xff]
    %v60 = vld [vmem:[#allocation6 + $0x10] sm:$0xff]
    %v61 = vld [vmem:[#allocation6 + $0x18] sm:$0xff]
    %v62 = vld [vmem:[#allocation6 + $0x20] sm:$0xff]
    %v63 = vld [vmem:[#allocation6 + $0x28] sm:$0xff]
    %v64 = vld [vmem:[#allocation6 + $0x30] sm:$0xff]
    %v65 = vld [vmem:[#allocation6 + $0x38] sm:$0xff]
    %v66 = vld [vmem:[#allocation6 + $0x40] sm:$0xff]
    %v67 = vld [vmem:[#allocation6 + $0x48] sm:$0xff]
    %v68 = vld [vmem:[#allocation6 + $0x50] sm:$0xff]
    %v69 = vld [vmem:[#allocation6 + $0x58] sm:$0xff]
    %v70 = vld [vmem:[#allocation6 + $0x60] sm:$0xff]
    %v71 = vld [vmem:[#allocation6 + $0x68] sm:$0xff]
    %v72 = vld [vmem:[#allocation6 + $0x70] sm:$0xff]
    %v73 = vld [vmem:[#allocation6 + $0x78] sm:$0xff]
    %v74 = vld [vmem:[%s2] sm:$0x1]
    %v76 = vlaneseq
    %v77 = vshrl.u32 %v76, 7
    %v78 = vsub.s32 0, %v77
    %v79 = vrot.slane %v74, %v78
    %81 = vmatprep.subr.mxu0 0.0
    %82 = vmatpush1.msra.mxu0 %v73
    %83 = vmatprep.subr.mxu0 0.0
    %84 = vmatpush1.msra.mxu0 %v72
    %85 = vmatprep.subr.mxu0 0.0
    %86 = vmatpush1.msra.mxu0 %v71
    %87 = vmatprep.subr.mxu0 0.0
    %88 = vmatpush1.msra.mxu0 %v70
    %89 = vmatprep.subr.mxu0 0.0
    %90 = vmatpush1.msra.mxu0 %v69
    %91 = vmatprep.subr.mxu0 0.0
    %92 = vmatpush1.msra.mxu0 %v68
    %93 = vmatprep.subr.mxu0 0.0
    %94 = vmatpush1.msra.mxu0 %v67
    %95 = vmatprep.subr.mxu0 0.0
    %96 = vmatpush1.msra.mxu0 %v66
    %97 = vmatprep.subr.mxu0 0.0
    %98 = vmatpush1.msra.mxu0 %v65
    %99 = vmatprep.subr.mxu0 0.0
    %100 = vmatpush1.msra.mxu0 %v64
    %101 = vmatprep.subr.mxu0 0.0
    %102 = vmatpush1.msra.mxu0 %v63
    %103 = vmatprep.subr.mxu0 0.0
    %104 = vmatpush1.msra.mxu0 %v62
    %105 = vmatprep.subr.mxu0 0.0
    %106 = vmatpush1.msra.mxu0 %v61
    %107 = vmatprep.subr.mxu0 0.0
    %108 = vmatpush1.msra.mxu0 %v60
    %109 = vmatprep.subr.mxu0 0.0
    %110 = vmatpush1.msra.mxu0 %v59
    %111 = vmatprep.subr.mxu0 0.0
    %112 = vmatpush1.msra.mxu0 %v58
    %113 = vmatprep.subr.mxu0 0.0
    %114 = vmatpush2.msra.mxu0 0.0
    %115 = vmatprep.subr.mxu0 0.0
    %116 = vmatpush2.msra.mxu0 0.0
    %117 = vmatprep.subr.mxu0 0.0
    %118 = vmatpush2.msra.mxu0 0.0
    %119 = vmatprep.subr.mxu0 0.0
    %120 = vmatpush2.msra.mxu0 0.0
    %121 = vmatprep.subr.mxu0 0.0
    %122 = vmatpush2.msra.mxu0 0.0
    %123 = vmatprep.subr.mxu0 0.0
    %124 = vmatpush2.msra.mxu0 0.0
    %125 = vmatprep.subr.mxu0 0.0
    %126 = vmatpush2.msra.mxu0 0.0
    %127 = vmatprep.subr.mxu0 0.0
    %128 = vmatpush2.msra.mxu0 0.0
    %129 = vmatprep.subr.mxu0 0.0
    %130 = vmatpush2.msra.mxu0 0.0
    %131 = vmatprep.subr.mxu0 0.0
    %132 = vmatpush2.msra.mxu0 0.0
    %133 = vmatprep.subr.mxu0 0.0
    %134 = vmatpush2.msra.mxu0 0.0
    %135 = vmatprep.subr.mxu0 0.0
    %136 = vmatpush2.msra.mxu0 0.0
    %137 = vmatprep.subr.mxu0 0.0
    %138 = vmatpush2.msra.mxu0 0.0
    %139 = vmatprep.subr.mxu0 0.0
    %140 = vmatpush2.msra.mxu0 0.0
    %141 = vmatprep.subr.mxu0 0.0
    %142 = vmatpush2.msra.mxu0 0.0
    %143 = vmatprep.subr.mxu0 0.0
    %144 = vmatpush2.msra.mxu0 0.0
    %145 = vmatprep.mubr.f32.mxu0 0.0
    %146 = vmatmul.mubr.f32.gmra.mxu0 %v57
    %v147 = vpop.f32.mrf.mxu0
    %v148 = vadd.f32 %v79, %v147
    %v149 = vpop.f32.mrf.mxu0
    %150 = vdwg.mxu0
    %151 = vst [vmem:[#allocation8] sm:$0xff] %v148
    // Predicated region
    $region26: #{tpu_custom_call.1} parent=1 // pred_check
      _
    $region27: #{tpu_custom_call.1} parent=1 // pred_check_branch
      %153 = sbr.rel (0) target = $region29
    $region28: #{tpu_custom_call.1} parent=1 // pred_region
      %s155 = ssub.s32 128, 128
      %156 = vsyncadd [#allocation5], %s155
      %s158 = sshll.u32 [#allocation8], 4
      %s159 = int_to_ptr.vmem [resolvable:$true] %s158
      %161 = dma.vmem_to_hbm [thread:$0]  %s159, 128, %s3, [#allocation5]
    $region29: #{tpu_custom_call.1} parent=1 // pred_fallthru
      _
    // Predicated region
    $region30: #{tpu_custom_call.1} parent=1 // pred_check
      _
    $region31: #{tpu_custom_call.1} parent=1 // pred_check_branch
      %163 = sbr.rel (0) target = $region33
    $region32: #{tpu_custom_call.1} parent=1 // pred_region
      %164 = dma.done [#allocation5], 128
    $region33: #{tpu_custom_call.1} parent=1 // pred_fallthru
      _
    %165 = vsyncpa [#allocation4], 1
    %166 = vsyncpa [#allocation7], 1
    %167 = vsyncpa [#allocation5], 1

</llo_original>
